<compile_context>
chip_gen: v5e
topology: v5e:2x2
jax: 0.10.0
libtpu: 0.0.40
codegen_flags: <defaults>
</compile_context>

<pallas_src>
import functools

import jax
import jax.numpy as jnp
from jax import lax
from jax.experimental import pallas as pl
from jax.experimental.pallas import tpu as pltpu


def _round_up(x: int, m: int) -> int:
    return ((x + m - 1) // m) * m


def _vmem_limit_bytes() -> int:
    """Generation-aware scoped-VMEM budget for this kernel."""
    cap = 64 * 1024 * 1024  # conservative default (v7x-class: 64 MiB per TC)
    try:
        cap = int(getattr(pltpu.get_tpu_info(), "vmem_capacity_bytes", cap))
    except Exception:
        pass
    if cap <= 64 * 1024 * 1024:
        return 48 * 1024 * 1024   # v7x: stay well clear of the 64 MiB physical
    return 64 * 1024 * 1024       # v5e / v6e: 128 MiB physical VMEM


def _distill_kl_kernel(ys_ref, yt_ref, out_ref, *, inv_T: float,
                       n_rows: int, tile_rows: int, mask_rows: bool):
    """Partial KL sum for one (tile_rows, C) batch tile of student/teacher logits."""
    ys = ys_ref[...].astype(jnp.float32) * inv_T
    yt = yt_ref[...].astype(jnp.float32) * inv_T

    if mask_rows:
        # The last tile reaches past B; Pallas pads the block with unspecified
        # data.  Zero those rows in BOTH tensors -> identical student/teacher
        # distributions -> exactly 0 KL contribution.
        rows_left = n_rows - pl.program_id(0) * tile_rows
        rid = lax.broadcasted_iota(jnp.int32, (tile_rows, 1), 0)
        valid = rid < rows_left
        ys = jnp.where(valid, ys, 0.0)
        yt = jnp.where(valid, yt, 0.0)

    # Numerically stable per-row shift.
    ys_sh = ys - jnp.max(ys, axis=1, keepdims=True)
    yt_sh = yt - jnp.max(yt, axis=1, keepdims=True)

    et = jnp.exp(yt_sh)                                    # teacher unnormalized probs
    z_t = jnp.sum(et, axis=1, keepdims=True)               # teacher partition fn
    z_s = jnp.sum(jnp.exp(ys_sh), axis=1, keepdims=True)   # student partition fn
    w = jnp.sum(et * (yt_sh - ys_sh), axis=1, keepdims=True)

    # Folded per-row KL: sum_c p_t * (log p_t - log p_s)
    #   = (1/Z_t) * sum_c e_t*(yt_sh - ys_sh) + log Z_s - log Z_t
    # (uses sum_c p_t == 1).  Per-row reciprocal kept exact (see header note).
    kl_row = w * pl.reciprocal(z_t, approx=False) + jnp.log(z_s) - jnp.log(z_t)

    tile_sum = jnp.sum(kl_row)
    # Replicate the scalar into a lane-dense (1, 8, 128) block: unmasked vst,
    # and every grid step owns a distinct output block (=> 'parallel' axis ok).
    out_ref[...] = jnp.full(out_ref.shape, tile_sum, dtype=jnp.float32)


def distill_kl(y_s: jax.Array, y_t: jax.Array, T: float) -> jax.Array:
    assert y_s.shape == y_t.shape and y_s.ndim == 2
    B, C = y_s.shape
    inv_T = 1.0 / float(T)
    itemsize = jnp.dtype(y_s.dtype).itemsize

    vmem_limit = _vmem_limit_bytes()
    # VMEM model per tile element: 2 inputs x 2 pipeline buffers (native dtype)
    # + ~5 tile-sized f32 temps live in the kernel body; keep ~50% headroom.
    bytes_per_tile_elem = 4 * itemsize + 5 * 4
    target_elems = (vmem_limit // 2) // bytes_per_tile_elem

    if 8 * C * bytes_per_tile_elem > vmem_limit // 2:
        # TODO(synk): online log-sum-exp over a class-axis grid for vocab-scale C.
        raise NotImplementedError(
            f"class dim C={C} too large for a single-row-block VMEM tile")

    # Largest batch tile under the VMEM budget, aligned to the sublane (8) rule.
    tb = max(8, (target_elems // C) // 8 * 8)
    tb = min(tb, _round_up(B, 8))
    # Keep >= 2 grid steps (v7x megacore: the grid axis is 'parallel' across
    # its two TensorCores) whenever the halved tile is still >= ~1 MiB.
    if tb >= B and B > 8:
        half = _round_up((B + 1) // 2, 8)
        if half * C * itemsize >= (1 << 20):
            tb = half
    num_tiles = pl.cdiv(B, tb)
    mask_rows = (num_tiles * tb) != B

    in_spec = pl.BlockSpec((tb, C), lambda i: (i, 0))

    cost = pl.CostEstimate(
        flops=12 * B * C,
        transcendentals=2 * B * C,          # two exps per element; logs are per-row
        bytes_accessed=2 * B * C * itemsize + num_tiles * 8 * 128 * 4,
    )

    kernel = functools.partial(
        _distill_kl_kernel, inv_T=inv_T, n_rows=B, tile_rows=tb,
        mask_rows=mask_rows)

    partials = pl.pallas_call(
        kernel,
        grid=(num_tiles,),
        in_specs=[in_spec, in_spec],
        out_specs=pl.BlockSpec((1, 8, 128), lambda i: (i, 0, 0)),
        out_shape=jax.ShapeDtypeStruct((num_tiles, 8, 128), jnp.float32),
        compiler_params=pltpu.CompilerParams(
            dimension_semantics=("parallel",),
            vmem_limit_bytes=vmem_limit,
        ),
        cost_estimate=cost,
    )(y_s, y_t)

    # Tiny final reduction + T^2/B scale in plain JAX (B = original batch).
    return jnp.sum(partials[:, 0, 0]) * (float(T) * float(T)) / B


def _distill_kl_ref(y_s, y_t, T):
    # Pure-JAX reference matching the PyTorch module.
    log_ps = jax.nn.log_softmax(y_s.astype(jnp.float32) / T, axis=1)
    p_t = jax.nn.softmax(y_t.astype(jnp.float32) / T, axis=1)
    log_pt = jax.nn.log_softmax(y_t.astype(jnp.float32) / T, axis=1)
    return jnp.sum(p_t * (log_pt - log_ps)) * (T * T) / y_s.shape[0]


if __name__ == "__main__":
    key = jax.random.PRNGKey(0)
    ks = jax.random.split(key, 8)
    T = 4.0

    cases = [
        (8, 32),       # tiny single tile, exact fit (batch of class logits)
        (13, 40),      # B not a multiple of 8 -> padded block + in-kernel row mask
        (200, 64),     # narrow class dim, natural (B, C) layout (no pad/transpose)
        (1024, 512),   # multi-tile 'parallel' grid (2 tiles, exact fit)
        (1100, 512),   # multi-tile + ragged last tile (in-kernel mask)
    ]
    for idx, (B, C) in enumerate(cases):
        k1, k2 = jax.random.split(ks[idx])
        y_s = jax.random.normal(k1, (B, C), dtype=jnp.float32)
        y_t = jax.random.normal(k2, (B, C), dtype=jnp.float32)
        loss = distill_kl(y_s, y_t, T)
        jax.block_until_ready(loss)
        ref = _distill_kl_ref(y_s, y_t, T)
        assert jnp.allclose(loss, ref, atol=1e-5, rtol=1e-4), (B, C, loss, ref)

    print("KERNEL_OK")
</pallas_src>

<mosaic_0001>
module attributes {stable_mosaic.version = 11 : i64} {
  func.func @_distill_kl_kernel(%arg0: i32, %arg1: memref<8x32xf32, #tpu.memory_space<vmem>>, %arg2: memref<8x32xf32, #tpu.memory_space<vmem>>, %arg3: memref<1x8x128xf32, #tpu.memory_space<vmem>>) attributes {dimension_semantics = [#tpu.dimension_semantics<parallel>], iteration_bounds = array<i64: 1>, scalar_prefetch = 0 : i64, scratch_operands = 0 : i64, tpu.core_type = #tpu.core_type<tc>, window_params = [{transform_indices = @transform_0, window_bounds = array<i64: 8, 32>}, {transform_indices = @transform_1, window_bounds = array<i64: 8, 32>}, {transform_indices = @transform_2, window_bounds = array<i64: 1, 8, 128>}]} {
    %c0 = arith.constant 0 : index
    %c0_0 = arith.constant 0 : index
    %0 = vector.load %arg1[%c0, %c0_0] : memref<8x32xf32, #tpu.memory_space<vmem>>, vector<8x32xf32>
    %cst = arith.constant 2.500000e-01 : f32
    %1 = vector.broadcast %cst : f32 to vector<8x32xf32>
    %2 = arith.mulf %0, %1 : vector<8x32xf32>
    %c0_1 = arith.constant 0 : index
    %c0_2 = arith.constant 0 : index
    %3 = vector.load %arg2[%c0_1, %c0_2] : memref<8x32xf32, #tpu.memory_space<vmem>>, vector<8x32xf32>
    %cst_3 = arith.constant 2.500000e-01 : f32
    %4 = vector.broadcast %cst_3 : f32 to vector<8x32xf32>
    %5 = arith.mulf %3, %4 : vector<8x32xf32>
    %cst_4 = arith.constant dense<0xFF800000> : vector<8xf32>
    %6 = vector.multi_reduction <maximumf>, %2, %cst_4 [1] : vector<8x32xf32> to vector<8xf32>
    %7 = vector.shape_cast %6 : vector<8xf32> to vector<8x1xf32>
    %8 = vector.broadcast %7 : vector<8x1xf32> to vector<8x32xf32>
    %9 = arith.subf %2, %8 : vector<8x32xf32>
    %cst_5 = arith.constant dense<0xFF800000> : vector<8xf32>
    %10 = vector.multi_reduction <maximumf>, %5, %cst_5 [1] : vector<8x32xf32> to vector<8xf32>
    %11 = vector.shape_cast %10 : vector<8xf32> to vector<8x1xf32>
    %12 = vector.broadcast %11 : vector<8x1xf32> to vector<8x32xf32>
    %13 = arith.subf %5, %12 : vector<8x32xf32>
    %14 = math.exp %13 : vector<8x32xf32>
    %cst_6 = arith.constant dense<0.000000e+00> : vector<8xf32>
    %15 = vector.multi_reduction <add>, %14, %cst_6 [1] : vector<8x32xf32> to vector<8xf32>
    %16 = vector.shape_cast %15 : vector<8xf32> to vector<8x1xf32>
    %17 = math.exp %9 : vector<8x32xf32>
    %cst_7 = arith.constant dense<0.000000e+00> : vector<8xf32>
    %18 = vector.multi_reduction <add>, %17, %cst_7 [1] : vector<8x32xf32> to vector<8xf32>
    %19 = vector.shape_cast %18 : vector<8xf32> to vector<8x1xf32>
    %20 = arith.subf %13, %9 : vector<8x32xf32>
    %21 = arith.mulf %14, %20 : vector<8x32xf32>
    %cst_8 = arith.constant dense<0.000000e+00> : vector<8xf32>
    %22 = vector.multi_reduction <add>, %21, %cst_8 [1] : vector<8x32xf32> to vector<8xf32>
    %23 = vector.shape_cast %22 : vector<8xf32> to vector<8x1xf32>
    %24 = tpu.reciprocal %16 : vector<8x1xf32> -> vector<8x1xf32>
    %25 = arith.mulf %23, %24 : vector<8x1xf32>
    %26 = math.log %19 : vector<8x1xf32>
    %27 = arith.addf %25, %26 : vector<8x1xf32>
    %28 = math.log %16 : vector<8x1xf32>
    %29 = arith.subf %27, %28 : vector<8x1xf32>
    %30 = vector.shape_cast %29 : vector<8x1xf32> to vector<1x8x1xf32>
    %cst_9 = arith.constant dense<0.000000e+00> : vector<1xf32>
    %31 = vector.multi_reduction <add>, %30, %cst_9 [1, 2] : vector<1x8x1xf32> to vector<1xf32>
    %32 = vector.shape_cast %31 : vector<1xf32> to vector<1x1x1xf32>
    %33 = vector.extract %32[0, 0, 0] : f32 from vector<1x1x1xf32>
    %34 = vector.broadcast %33 : f32 to vector<1x8x128xf32>
    %c0_10 = arith.constant 0 : index
    %c0_11 = arith.constant 0 : index
    %c0_12 = arith.constant 0 : index
    %35 = vector.load %arg3[%c0_10, %c0_11, %c0_12] : memref<1x8x128xf32, #tpu.memory_space<vmem>>, vector<1x8x128xf32>
    tpu.vector_store %arg3[%c0_10, %c0_11, %c0_12], %34 {strides = array<i32>} : memref<1x8x128xf32, #tpu.memory_space<vmem>>, vector<1x8x128xf32>,
    return
  }
  func.func @transform_0(%arg0: i32) -> (i32, i32) {
    %c0_i32 = arith.constant 0 : i32
    %c0_i32_0 = arith.constant 0 : i32
    return %arg0, %c0_i32 : i32, i32
  }
  func.func @transform_1(%arg0: i32) -> (i32, i32) {
    %c0_i32 = arith.constant 0 : i32
    %c0_i32_0 = arith.constant 0 : i32
    return %arg0, %c0_i32 : i32, i32
  }
  func.func @transform_2(%arg0: i32) -> (i32, i32, i32) {
    %c0_i32 = arith.constant 0 : i32
    %c0_i32_0 = arith.constant 0 : i32
    %c0_i32_1 = arith.constant 0 : i32
    return %arg0, %c0_i32, %c0_i32_0 : i32, i32, i32
  }
}

</mosaic_0001>

<llo_original>
// kernel: tpu_custom_call.1
$region0: #{tpu_custom_call.1}
  #allocation0 [shape = 'u32[]', space=smem, size = 0x4, offset = 0x4, fixed_abs, tag = 'smem constant byte address 0x4 - core index']
  #allocation1 [shape = 'u32[72,128]{1,0:T(1,128)}', space=vmem, size = 0x9000, scoped, tag = 'internal scratch']
  %s0 = inlined_call_operand.hbm [shape: f32[8,32], index: 0, kind: input, shape index: {}]
  %s1 = inlined_call_operand.hbm [shape: f32[8,32], index: 1, kind: input, shape index: {}]
  %s2 = inlined_call_operand.hbm [shape: f32[1,8,128], index: 2, kind: output, shape index: {}]
  %s3 = sld [smem:[#allocation0]]
  $region26: #{tpu_custom_call.1} parent=0
    _
  %s5 = ssub.s32 1, %s3
  %s6 = scalar_select 0, %s5, %s3
  $region1: #{tpu_custom_call.1} parent=0
    #allocation2 [shape = 'u8[4096]{0}', space=vmem, size = 0x1000, scoped, tag = 'input window, operand 0, single buffered']
    #allocation3 [shape = 's32[1]{0}', space=sflag, size = 0x4, scoped, tag = 'scoped memory for tpu_custom_call.1']
    #allocation4 [shape = 's32[1]{0}', space=sflag, size = 0x4, scoped, tag = 'scoped memory for tpu_custom_call.1']
    #allocation5 [shape = 'u8[4096]{0}', space=vmem, size = 0x1000, scoped, tag = 'input window, operand 1, single buffered']
    #allocation6 [shape = 's32[1]{0}', space=sflag, size = 0x4, scoped, tag = 'scoped memory for tpu_custom_call.1']
    #allocation7 [shape = 'u8[4096]{0}', space=vmem, size = 0x1000, scoped, tag = 'output window, operand 0, single buffered']
    %7 = vsyncpa [#allocation3], 0
    %8 = vsyncpa [#allocation6], 0
    %9 = vsyncpa [#allocation4], 0
    // Predicated region
    $region2: #{tpu_custom_call.1} parent=1 // pred_check
      _
    $region3: #{tpu_custom_call.1} parent=1 // pred_check_branch
      %11 = sbr.rel (0) target = $region5
    $region4: #{tpu_custom_call.1} parent=1 // pred_region
      %13 = vsyncadd [#allocation3], 0
      %s15 = sshll.u32 %s0, 4
      %s16 = int_to_ptr.hbm [resolvable:$true] %s15
      %s17 = sshll.u32 [#allocation2], 4
      %s18 = int_to_ptr.vmem [resolvable:$true] %s17
      %20 = dma.hbm_to_vmem [thread:$0]  %s16, 128, %s18, [#allocation3]
    $region5: #{tpu_custom_call.1} parent=1 // pred_fallthru
      _
    // Predicated region
    $region6: #{tpu_custom_call.1} parent=1 // pred_check
      _
    $region7: #{tpu_custom_call.1} parent=1 // pred_check_branch
      %22 = sbr.rel (0) target = $region9
    $region8: #{tpu_custom_call.1} parent=1 // pred_region
      %24 = vsyncadd [#allocation6], 0
      %s26 = sshll.u32 %s1, 4
      %s27 = int_to_ptr.hbm [resolvable:$true] %s26
      %s28 = sshll.u32 [#allocation5], 4
      %s29 = int_to_ptr.vmem [resolvable:$true] %s28
      %31 = dma.hbm_to_vmem [thread:$0]  %s27, 128, %s29, [#allocation6]
    $region9: #{tpu_custom_call.1} parent=1 // pred_fallthru
      _
    // Predicated region
    $region10: #{tpu_custom_call.1} parent=1 // pred_check
      _
    $region11: #{tpu_custom_call.1} parent=1 // pred_check_branch
      %33 = sbr.rel (0) target = $region13
    $region12: #{tpu_custom_call.1} parent=1 // pred_region
      %35 = dma.done [#allocation3], 128
    $region13: #{tpu_custom_call.1} parent=1 // pred_fallthru
      _
    // Predicated region
    $region14: #{tpu_custom_call.1} parent=1 // pred_check
      _
    $region15: #{tpu_custom_call.1} parent=1 // pred_check_branch
      %37 = sbr.rel (0) target = $region17
    $region16: #{tpu_custom_call.1} parent=1 // pred_region
      %39 = dma.done [#allocation6], 128
    $region17: #{tpu_custom_call.1} parent=1 // pred_fallthru
      _
    %v40 = vld [vmem:[#allocation2] sm:$0xff]
    %v41 = vmul.f32 %v40, 0.25
    %v42 = vld [vmem:[#allocation5] sm:$0xff]
    %v43 = vmul.f32 %v42, 0.25
    %vm44 = vcmask 261120
    %v45 = vsel %vm44, %v41, -inf
    %46 = vmax.xlane.f32.xlu0 %v45
    %v47 = vpop.xlane.xlu0 %46
    %v48 = vsub.f32 %v41, %v47
    %v49 = vsel %vm44, %v43, -inf
    %50 = vmax.xlane.f32.xlu0 %v49
    %v51 = vpop.xlane.xlu0 %50
    %v52 = vsub.f32 %v43, %v51
    %v53 = vmul.f32 %v52, 1.442695
    %v54 = vpow.pop %v53
    %v55 = vsel %vm44, %v54, 0.0
    %56 = vadd.xlane.f32.xlu0 %v55
    %v57 = vpop.xlane.xlu0 %56
    %v58 = vmul.f32 %v48, 1.442695
    %v59 = vpow.pop %v58
    %v60 = vsel %vm44, %v59, 0.0
    %61 = vadd.xlane.f32.xlu0 %v60
    %v62 = vpop.xlane.xlu0 %61
    %v63 = vsub.f32 %v52, %v48
    %v64 = vmul.f32 %v54, %v63
    %v65 = vsel %vm44, %v64, 0.0
    %66 = vadd.xlane.f32.xlu0 %v65
    %v67 = vpop.xlane.xlu0 %66
    %v68 = vrcp.pop %v57
    %v69 = vmul.f32 %v57, %v68
    %v70 = vsub.f32 1.0, %v69
    %v71 = vmul.f32 %v68, %v70
    %v72 = vadd.f32 %v68, %v71
    %vm73 = vweird.f32 %v57
    %vm74 = vweird.f32 %v68
    %vm75 = vmor %vm73, %vm74
    %v76 = vsel %vm75, %v68, %v72
    %v77 = vand.u32 2147483647, %v57
    %vm78 = vcmp.eq.f32.partialorder %v77, 8.507059e+37
    %v79 = vand.u32 %v57, 2147483648
    %v80 = vor.u32 1.1754944e-38, %v79
    %v81 = vsel %vm78, %v80, %v76
    %v82 = vmul.f32 %v67, %v81
    %v83 = vlog2.pop %v62
    %v84 = vmul.f32 %v83, 0.6931472
    %v85 = vadd.f32 %v82, %v84
    %v86 = vlog2.pop %v57
    %v87 = vmul.f32 %v86, 0.6931472
    %v88 = vsub.f32 %v85, %v87
    %vm89 = vcmask 7168
    %v90 = vsel %vm89, %v88, 0.0
    %91 = vadd.xlane.f32.xlu0 %v90
    %v92 = vpop.xlane.xlu0 %91
    %v93 = vrot.slane %v92, 4
    %v94 = vadd.f32 %v92, %v93
    %v95 = vrot.slane %v94, 2
    %v96 = vadd.f32 %v94, %v95
    %v97 = vrot.slane %v96, 1
    %v98 = vadd.f32 %v96, %v97
    %s99 = vtos %v98
    %v100 = vstv %s99
    %101 = vst [vmem:[#allocation7] sm:$0xff] %v100
    // Predicated region
    $region18: #{tpu_custom_call.1} parent=1 // pred_check
      _
    $region19: #{tpu_custom_call.1} parent=1 // pred_check_branch
      %103 = sbr.rel (0) target = $region21
    $region20: #{tpu_custom_call.1} parent=1 // pred_region
      %105 = vsyncadd [#allocation4], 0
      %s107 = sshll.u32 [#allocation7], 4
      %s108 = int_to_ptr.vmem [resolvable:$true] %s107
      %s109 = sshll.u32 %s2, 4
      %s110 = int_to_ptr.hbm [resolvable:$true] %s109
      %112 = dma.vmem_to_hbm [thread:$0]  %s108, 128, %s110, [#allocation4]
    $region21: #{tpu_custom_call.1} parent=1 // pred_fallthru
      _
    // Predicated region
    $region22: #{tpu_custom_call.1} parent=1 // pred_check
      _
    $region23: #{tpu_custom_call.1} parent=1 // pred_check_branch
      %114 = sbr.rel (0) target = $region25
    $region24: #{tpu_custom_call.1} parent=1 // pred_region
      %116 = dma.done [#allocation4], 128
    $region25: #{tpu_custom_call.1} parent=1 // pred_fallthru
      _
    %117 = vsyncpa [#allocation3], 1
    %118 = vsyncpa [#allocation6], 1
    %119 = vsyncpa [#allocation4], 1

</llo_original>
